<compile_context>
chip_gen: v5e
topology: v5e:2x2
jax: 0.10.0
libtpu: 0.0.40
codegen_flags: <defaults>
</compile_context>

<pallas_src>
import functools

import jax
import jax.numpy as jnp
from jax.experimental import pallas as pl
from jax.experimental.pallas import tpu as pltpu

EPS = 1e-5
LANES = 128   # pad T to a multiple of this (256 is preferable on v6e/v7x MXUs)

_COMPILER_PARAMS = pltpu.CompilerParams(
    dimension_semantics=("parallel",),
    vmem_limit_bytes=48 * 1024 * 1024,   # explicit; leaves headroom on v7x (64 MiB)
)

# ---------------------------------------------------------------------------
# Single-buffering probe for constant-index parameter inputs
# ---------------------------------------------------------------------------
_BUFFERED_SINGLE = None


def _buffered_single_supported():
    global _BUFFERED_SINGLE
    if _BUFFERED_SINGLE is None:
        try:
            def _probe(x_ref, o_ref):
                o_ref[...] = x_ref[...] + 1.0

            f = pl.pallas_call(
                _probe,
                out_shape=jax.ShapeDtypeStruct((8, 128), jnp.float32),
                grid=(2,),
                in_specs=[pl.BlockSpec((8, 128), lambda i: (0, 0),
                                       pipeline_mode=pl.Buffered(1))],
                out_specs=pl.BlockSpec((8, 128), lambda i: (0, 0)),
            )
            jax.block_until_ready(f(jnp.zeros((8, 128), jnp.float32)))
            _BUFFERED_SINGLE = True
        except Exception:
            _BUFFERED_SINGLE = False
    return _BUFFERED_SINGLE


def _param_spec(shape):
    zeros = (0,) * len(shape)
    index_map = lambda i, _z=zeros: _z
    if _buffered_single_supported():
        # Constant block index across the grid -> single buffer is enough.
        return pl.BlockSpec(shape, index_map, pipeline_mode=pl.Buffered(1))
    return pl.BlockSpec(shape, index_map)


# ---------------------------------------------------------------------------
# Kernel helpers
# ---------------------------------------------------------------------------
def _tap_input(x, o, T, t_idx):
    """x[:, t+o] with zeros outside [0, T): pltpu.roll (XLU) + lane mask, no copies."""
    Tp = x.shape[-1]
    if o == 0:
        return x
    xt = pltpu.roll(x, (-o) % Tp, 1)
    mask = (t_idx + o >= 0) & (t_idx + o < T)
    return jnp.where(mask, xt, 0.0)


# ---------------------------------------------------------------------------
# Pallas kernels
# ---------------------------------------------------------------------------
def _stem_kernel(x_ref, w_ref, p_ref, o_ref, *, K, T):
    # Conv1d(80 -> C, k=5, pad=2) + bias -> ReLU -> BN1, one batch element.
    Tp = x_ref.shape[-1]
    x = x_ref[0]                                                     # (80, Tp) f32
    t_idx = jax.lax.broadcasted_iota(jnp.int32, (1, Tp), 1)
    y = None
    for k in range(K):                                               # dilation 1
        o = k - K // 2
        xt = _tap_input(x, o, T, t_idx).astype(jnp.bfloat16)
        d = jnp.dot(w_ref[k], xt, preferred_element_type=jnp.float32)
        y = d if y is None else y + d
    p = p_ref[...]                                                   # (C, 3): b, s, t
    y = jnp.maximum(y + p[:, 0:1], 0.0) * p[:, 1:2] + p[:, 2:3]
    o_ref[0] = y.astype(o_ref.dtype)


def _bottle2neck_kernel(x_ref, c1w_ref, p1_ref, cw_ref, pc_ref, c3w_ref, p3_ref,
                        sew1_ref, seb1_ref, sew2_ref, out_ref, sum_ref=None,
                        *, nums, width, K, dil, T):
    # Fully fused Bottle2neck for one batch element; intermediates stay in VMEM.
    Tp = x_ref.shape[-1]
    xin = x_ref[0]                                                   # (C, Tp) bf16
    x32 = xin.astype(jnp.float32)
    t_idx = jax.lax.broadcasted_iota(jnp.int32, (1, Tp), 1)

    # conv1 (1x1) + bias -> ReLU -> BN1
    p1 = p1_ref[...]
    out = jnp.dot(c1w_ref[...], xin, preferred_element_type=jnp.float32)
    out = jnp.maximum(out + p1[:, 0:1], 0.0) * p1[:, 1:2] + p1[:, 2:3]   # (ws, Tp)

    # Res2Net group of dilated convs; conv3 is accumulated per branch using
    # column-split weights, so no branch-output concatenation is materialized.
    sp = None
    y = None
    for i in range(nums):                                            # static loop
        spx_i = out[i * width:(i + 1) * width, :]
        sp = spx_i if i == 0 else sp + spx_i
        cwi = cw_ref[i]                                              # (K, w, w) bf16
        pci = pc_ref[i]                                              # (w, 3) f32
        acc = None
        for k in range(K):
            o = (k - K // 2) * dil
            xt = _tap_input(sp, o, T, t_idx).astype(jnp.bfloat16)
            d = jnp.dot(cwi[k], xt, preferred_element_type=jnp.float32)
            acc = d if acc is None else acc + d
        sp = jnp.maximum(acc + pci[:, 0:1], 0.0) * pci[:, 1:2] + pci[:, 2:3]
        d3 = jnp.dot(c3w_ref[i], sp.astype(jnp.bfloat16),
                     preferred_element_type=jnp.float32)
        y = d3 if y is None else y + d3
    # last (pass-through) chunk of the conv1 output feeds conv3 directly
    y = y + jnp.dot(c3w_ref[nums], out[nums * width:, :].astype(jnp.bfloat16),
                    preferred_element_type=jnp.float32)

    p3 = p3_ref[...]                                                 # (planes, 4)
    y = jnp.maximum(y + p3[:, 0:1], 0.0) * p3[:, 1:2] + p3[:, 2:3]
    y = jnp.where(t_idx < T, y, 0.0)       # zero time padding before SE / residual

    # SE: mean over time -> 1x1 -> ReLU -> 1x1 -> sigmoid -> scale (tiny, f32)
    m = jnp.sum(y, axis=1, keepdims=True) * (1.0 / T)                # (planes, 1)
    h = jnp.maximum(
        jnp.dot(sew1_ref[...].astype(jnp.float32), m,
                preferred_element_type=jnp.float32) + seb1_ref[...], 0.0)
    g = jax.nn.sigmoid(
        jnp.dot(sew2_ref[...].astype(jnp.float32), h,
                preferred_element_type=jnp.float32) + p3[:, 3:4])

    blk = y * g + x32                                                # residual add
    out_ref[0] = blk.astype(out_ref.dtype)
    if sum_ref is not None:                # running residual sum for the next block
        sum_ref[0] = (blk + x32).astype(sum_ref.dtype)


def _tail_kernel(x1_ref, x2_ref, x3_ref, l4w_ref, l4p_ref, aw_ref, attn_ref,
                 bn2_ref, fcw_ref, fcp_ref, o_ref, *, T):
    # layer4 (1x1 conv on concat(x1,x2,x3)) + ReLU + ASP + bn2 + fc + bn3.
    Tp = x1_ref.shape[-1]
    l4p = l4p_ref[...]                                               # (D, 2)
    # layer4 via column-split weights: y = W1@x1 + W2@x2 + W3@x3 (no 3C concat)
    y = (jnp.dot(l4w_ref[0], x1_ref[0], preferred_element_type=jnp.float32)
         + jnp.dot(l4w_ref[1], x2_ref[0], preferred_element_type=jnp.float32)
         + jnp.dot(l4w_ref[2], x3_ref[0], preferred_element_type=jnp.float32))
    y = jnp.maximum(y + l4p[:, 0:1], 0.0)                            # (D, Tp)

    # Attentive statistics pooling (channel-shared tanh attention, see TODO).
    h = jnp.tanh(jnp.dot(aw_ref[...], y.astype(jnp.bfloat16),
                         preferred_element_type=jnp.float32) + l4p[:, 1:2])
    logits = jnp.dot(attn_ref[...], h.astype(jnp.bfloat16),
                     preferred_element_type=jnp.float32)             # (1, Tp)
    t_idx = jax.lax.broadcasted_iota(jnp.int32, (1, Tp), 1)
    logits = jnp.where(t_idx < T, logits, -1e30)
    logits = logits - jnp.max(logits, axis=1, keepdims=True)
    e = jnp.exp(logits)
    w = e / jnp.sum(e, axis=1, keepdims=True)                        # exact softmax
    mu = jnp.sum(y * w, axis=1, keepdims=True)                       # (D, 1)
    var = jnp.sum(y * y * w, axis=1, keepdims=True) - mu * mu
    sg = jnp.sqrt(jnp.maximum(var, 1e-5))

    # bn2 + fc + bn3, fc split into mu / sigma column halves (no stat concat).
    bn2 = bn2_ref[...]                                               # (D, 4)
    mu_n = mu * bn2[:, 0:1] + bn2[:, 1:2]
    sg_n = sg * bn2[:, 2:3] + bn2[:, 3:4]
    fcp = fcp_ref[...]                                               # (E, 3)
    emb = (jnp.dot(fcw_ref[0].astype(jnp.float32), mu_n,
                   preferred_element_type=jnp.float32)
           + jnp.dot(fcw_ref[1].astype(jnp.float32), sg_n,
                     preferred_element_type=jnp.float32)
           + fcp[:, 0:1])
    o_ref[0] = emb * fcp[:, 1:2] + fcp[:, 2:3]                       # (E, 1)


# ---------------------------------------------------------------------------
# pallas_call wrappers
# ---------------------------------------------------------------------------
def stem(x, P, T):
    B, Ci, Tp = x.shape
    K, C, _ = P["conv1_w"].shape
    kern = functools.partial(_stem_kernel, K=K, T=T)
    return pl.pallas_call(
        kern,
        out_shape=jax.ShapeDtypeStruct((B, C, Tp), jnp.bfloat16),
        grid=(B,),
        in_specs=[pl.BlockSpec((1, Ci, Tp), lambda i: (i, 0, 0)),
                  _param_spec(P["conv1_w"].shape),
                  _param_spec(P["stem_p"].shape)],
        out_specs=pl.BlockSpec((1, C, Tp), lambda i: (i, 0, 0)),
        compiler_params=_COMPILER_PARAMS,
    )(x, P["conv1_w"], P["stem_p"])


def bottle2neck(x, p, T, emit_sum):
    B, C, Tp = x.shape
    kern = functools.partial(_bottle2neck_kernel, nums=p["nums"], width=p["width"],
                             K=p["K"], dil=p["dilation"], T=T)
    act_spec = pl.BlockSpec((1, C, Tp), lambda i: (i, 0, 0))
    params = [p["conv1_w"], p["p1"], p["convs_w"], p["pc"], p["conv3_w"],
              p["p3"], p["se_w1"], p["se_b1"], p["se_w2"]]
    out_sds = jax.ShapeDtypeStruct((B, C, Tp), jnp.bfloat16)
    out_shape = (out_sds, out_sds) if emit_sum else out_sds
    out_specs = (act_spec, act_spec) if emit_sum else act_spec
    return pl.pallas_call(
        kern,
        out_shape=out_shape,
        grid=(B,),
        in_specs=[act_spec] + [_param_spec(a.shape) for a in params],
        out_specs=out_specs,
        compiler_params=_COMPILER_PARAMS,
    )(x, *params)


def tail(x1, x2, x3, P, T):
    B, C, Tp = x1.shape
    E = P["fc_p"].shape[0]
    kern = functools.partial(_tail_kernel, T=T)
    act_spec = pl.BlockSpec((1, C, Tp), lambda i: (i, 0, 0))
    params = [P["layer4_w"], P["l4asp_b"], P["asp_w"], P["asp_attn"],
              P["bn2_p"], P["fc_w"], P["fc_p"]]
    out = pl.pallas_call(
        kern,
        out_shape=jax.ShapeDtypeStruct((B, E, 1), jnp.float32),
        grid=(B,),
        in_specs=[act_spec, act_spec, act_spec] + [_param_spec(a.shape) for a in params],
        out_specs=pl.BlockSpec((1, E, 1), lambda i: (i, 0, 0)),
        compiler_params=_COMPILER_PARAMS,
    )(x1, x2, x3, *params)
    return out[:, :, 0]                                              # (B, E)


# ---------------------------------------------------------------------------
# Deterministic parameter construction (bf16 weights, packed bias/BN, split cols)
# ---------------------------------------------------------------------------
class KeyGen:
    def __init__(self, seed):
        self.key = jax.random.PRNGKey(seed)

    def __call__(self):
        self.key, sub = jax.random.split(self.key)
        return sub


def init_w(kg, shape, scale=0.05):
    return scale * jax.random.normal(kg(), shape, dtype=jnp.float32)


def init_bn(kg, c):
    gamma = 1.0 + 0.1 * jax.random.normal(kg(), (c, 1), dtype=jnp.float32)
    beta = 0.1 * jax.random.normal(kg(), (c, 1), dtype=jnp.float32)
    mean = 0.1 * jax.random.normal(kg(), (c, 1), dtype=jnp.float32)
    var = 0.5 + 0.1 * jnp.abs(jax.random.normal(kg(), (c, 1), dtype=jnp.float32))
    s = gamma / jnp.sqrt(var + EPS)
    t = beta - mean * s
    return s, t


def conv_taps(w):
    # PyTorch Conv1d weight (Co, Ci, K) -> per-tap (K, Co, Ci), bf16 for the MXU.
    return jnp.transpose(w, (2, 0, 1)).astype(jnp.bfloat16)


def split_cols(w, n):
    # (Co, n*Ci) -> (n, Co, Ci) column blocks, bf16: enables concat-free accumulation.
    co, ci_n = w.shape
    return jnp.transpose(w.reshape(co, n, ci_n // n), (1, 0, 2)).astype(jnp.bfloat16)


def init_bottle2neck(kg, inplanes, planes, K, dilation, scale=8, bottleneck=128):
    width = planes // scale
    nums = scale - 1
    p = {"width": width, "nums": nums, "K": K, "dilation": dilation}
    p["conv1_w"] = init_w(kg, (width * scale, inplanes)).astype(jnp.bfloat16)
    c1b = init_w(kg, (width * scale, 1))
    s1, t1 = init_bn(kg, width * scale)
    p["p1"] = jnp.concatenate([c1b, s1, t1], axis=1)                 # (ws, 3)
    cws, pcs = [], []
    for _ in range(nums):
        cws.append(conv_taps(init_w(kg, (width, width, K))))          # (K, w, w)
        cb = init_w(kg, (width, 1))
        cs, ct = init_bn(kg, width)
        pcs.append(jnp.concatenate([cb, cs, ct], axis=1))              # (w, 3)
    p["convs_w"] = jnp.stack(cws)                                      # (nums, K, w, w)
    p["pc"] = jnp.stack(pcs)                                           # (nums, w, 3)
    p["conv3_w"] = split_cols(init_w(kg, (planes, width * scale)), scale)  # (scale, planes, w)
    c3b = init_w(kg, (planes, 1))
    s3, t3 = init_bn(kg, planes)
    seb2 = init_w(kg, (planes, 1))
    p["p3"] = jnp.concatenate([c3b, s3, t3, seb2], axis=1)             # (planes, 4)
    p["se_w1"] = init_w(kg, (bottleneck, planes)).astype(jnp.bfloat16)
    p["se_b1"] = init_w(kg, (bottleneck, 1))
    p["se_w2"] = init_w(kg, (planes, bottleneck)).astype(jnp.bfloat16)
    return p


def init_ecapa(kg, n_mels=80, embedding_dim=192, channel=512):
    P = {}
    P["conv1_w"] = conv_taps(init_w(kg, (channel, n_mels, 5)))         # (5, C, 80)
    c1b = init_w(kg, (channel, 1))
    s1, t1 = init_bn(kg, channel)
    P["stem_p"] = jnp.concatenate([c1b, s1, t1], axis=1)               # (C, 3)
    P["layer1"] = init_bottle2neck(kg, channel, channel, 3, 2)
    P["layer2"] = init_bottle2neck(kg, channel, channel, 3, 3)
    P["layer3"] = init_bottle2neck(kg, channel, channel, 3, 4)
    D = 3 * channel
    P["layer4_w"] = split_cols(init_w(kg, (D, D)), 3)                  # (3, D, C)
    l4b = init_w(kg, (D, 1))
    asp_b = init_w(kg, (D, 1))
    P["l4asp_b"] = jnp.concatenate([l4b, asp_b], axis=1)               # (D, 2)
    P["asp_w"] = init_w(kg, (D, D)).astype(jnp.bfloat16)
    P["asp_attn"] = init_w(kg, (1, D)).astype(jnp.bfloat16)
    s2, t2 = init_bn(kg, 2 * D)
    P["bn2_p"] = jnp.concatenate([s2[:D], t2[:D], s2[D:], t2[D:]], axis=1)   # (D, 4)
    P["fc_w"] = split_cols(init_w(kg, (embedding_dim, 2 * D)), 2)      # (2, E, D)
    fcb = init_w(kg, (embedding_dim, 1))
    s3, t3 = init_bn(kg, embedding_dim)
    P["fc_p"] = jnp.concatenate([fcb, s3, t3], axis=1)                 # (E, 3)
    return P


# ---------------------------------------------------------------------------
# Model forward: 5 fused pallas_calls total (stem, 3 blocks, tail)
# ---------------------------------------------------------------------------
def _round_up(n, m):
    return ((n + m - 1) // m) * m


def ecapa_forward(x, P):
    x = x[:, 0]                                    # squeeze(1): (B, 80, T)
    T = x.shape[-1]
    Tp = _round_up(T, LANES)
    if Tp != T:                                    # lane-dense time axis (padded once)
        x = jnp.pad(x, ((0, 0), (0, 0), (0, Tp - T)))
    x0 = stem(x, P, T)                                             # conv1+relu+bn1
    x1, s1 = bottle2neck(x0, P["layer1"], T, emit_sum=True)        # s1 = x0 + x1
    x2, s2 = bottle2neck(s1, P["layer2"], T, emit_sum=True)        # s2 = x0 + x1 + x2
    x3 = bottle2neck(s2, P["layer3"], T, emit_sum=False)
    return tail(x1, x2, x3, P, T)                                  # (B, embedding_dim)


if __name__ == "__main__":
    B, T = 2, 120                        # T pads to one 128-lane tile; pad cols masked
    channel, embedding_dim = 64, 32      # scale=8 -> width=8
    kg = KeyGen(0)
    params = init_ecapa(kg, n_mels=80, embedding_dim=embedding_dim, channel=channel)
    x = 0.1 * jax.random.normal(jax.random.PRNGKey(0), (B, 1, 80, T), dtype=jnp.float32)

    out = ecapa_forward(x, params)
    out = jax.block_until_ready(out)
    assert out.shape == (B, embedding_dim), out.shape
    assert bool(jnp.all(jnp.isfinite(out)))
    print("KERNEL_OK")
</pallas_src>

<mosaic_0001>
module attributes {stable_mosaic.version = 11 : i64} {
  func.func @_probe(%arg0: i32, %arg1: memref<8x128xf32, #tpu.memory_space<vmem>>, %arg2: memref<8x128xf32, #tpu.memory_space<vmem>>) attributes {dimension_semantics = [#tpu.dimension_semantics<arbitrary>], iteration_bounds = array<i64: 2>, scalar_prefetch = 0 : i64, scratch_operands = 0 : i64, tpu.core_type = #tpu.core_type<tc>, window_params = [{pipeline_mode = #tpu.pipeline_mode<synchronous>, transform_indices = @transform_0, window_bounds = array<i64: 8, 128>}, {pipeline_mode = #tpu.pipeline_mode<synchronous>, transform_indices = @transform_1, window_bounds = array<i64: 8, 128>}]} {
    %c0 = arith.constant 0 : index
    %c0_0 = arith.constant 0 : index
    %0 = vector.load %arg1[%c0, %c0_0] : memref<8x128xf32, #tpu.memory_space<vmem>>, vector<8x128xf32>
    %cst = arith.constant 1.000000e+00 : f32
    %1 = vector.broadcast %cst : f32 to vector<8x128xf32>
    %2 = arith.addf %0, %1 : vector<8x128xf32>
    %c0_1 = arith.constant 0 : index
    %c0_2 = arith.constant 0 : index
    %3 = vector.load %arg2[%c0_1, %c0_2] : memref<8x128xf32, #tpu.memory_space<vmem>>, vector<8x128xf32>
    tpu.vector_store %arg2[%c0_1, %c0_2], %2 {strides = array<i32>} : memref<8x128xf32, #tpu.memory_space<vmem>>, vector<8x128xf32>,
    return
  }
  func.func @transform_0(%arg0: i32) -> (i32, i32) {
    %c0_i32 = arith.constant 0 : i32
    %c0_i32_0 = arith.constant 0 : i32
    %c0_i32_1 = arith.constant 0 : i32
    return %c0_i32, %c0_i32_0 : i32, i32
  }
  func.func @transform_1(%arg0: i32) -> (i32, i32) {
    %c0_i32 = arith.constant 0 : i32
    %c0_i32_0 = arith.constant 0 : i32
    %c0_i32_1 = arith.constant 0 : i32
    return %c0_i32, %c0_i32_0 : i32, i32
  }
}

module attributes {stable_mosaic.version = 11 : i64} {
  func.func @_stem_kernel(%arg0: i32, %arg1: memref<1x80x128xf32, #tpu.memory_space<vmem>>, %arg2: memref<5x64x80xbf16, #tpu.memory_space<vmem>>, %arg3: memref<64x3xf32, #tpu.memory_space<vmem>>, %arg4: memref<1x64x128xbf16, #tpu.memory_space<vmem>>) attributes {dimension_semantics = [#tpu.dimension_semantics<parallel>], iteration_bounds = array<i64: 2>, scalar_prefetch = 0 : i64, scratch_operands = 0 : i64, tpu.core_type = #tpu.core_type<tc>, window_params = [{transform_indices = @transform_0, window_bounds = array<i64: 1, 80, 128>}, {pipeline_mode = #tpu.pipeline_mode<synchronous>, transform_indices = @transform_1, window_bounds = array<i64: 5, 64, 80>}, {pipeline_mode = #tpu.pipeline_mode<synchronous>, transform_indices = @transform_2, window_bounds = array<i64: 64, 3>}, {transform_indices = @transform_3, window_bounds = array<i64: 1, 64, 128>}]} {
    %c0 = arith.constant 0 : index
    %c0_0 = arith.constant 0 : index
    %c0_1 = arith.constant 0 : index
    %0 = vector.load %arg1[%c0, %c0_0, %c0_1] : memref<1x80x128xf32, #tpu.memory_space<vmem>>, vector<1x80x128xf32>
    %1 = vector.shape_cast %0 : vector<1x80x128xf32> to vector<80x128xf32>
    %2 = tpu.iota {dimensions = array<i32: 1>} : vector<1x128xi32>
    %c2_i32 = arith.constant 2 : i32
    %3 = tpu.dynamic_rotate %1 by %c2_i32 dim 1 : vector<80x128xf32>, i32 -> vector<80x128xf32>
    %c-2_i32 = arith.constant -2 : i32
    %4 = vector.broadcast %c-2_i32 : i32 to vector<1x128xi32>
    %5 = arith.addi %2, %4 : vector<1x128xi32>
    %c0_i32 = arith.constant 0 : i32
    %6 = vector.broadcast %c0_i32 : i32 to vector<1x128xi32>
    %7 = arith.cmpi sge, %5, %6 : vector<1x128xi32>
    %c-2_i32_2 = arith.constant -2 : i32
    %8 = vector.broadcast %c-2_i32_2 : i32 to vector<1x128xi32>
    %9 = arith.addi %2, %8 : vector<1x128xi32>
    %c120_i32 = arith.constant 120 : i32
    %10 = vector.broadcast %c120_i32 : i32 to vector<1x128xi32>
    %11 = arith.cmpi slt, %9, %10 : vector<1x128xi32>
    %12 = arith.andi %7, %11 : vector<1x128xi1>
    %cst = arith.constant 0.000000e+00 : f32
    %13 = vector.shape_cast %12 : vector<1x128xi1> to vector<1x128xi1>
    %14 = vector.broadcast %13 : vector<1x128xi1> to vector<80x128xi1>
    %15 = vector.broadcast %cst : f32 to vector<80x128xf32>
    %16 = arith.select %14, %3, %15 : vector<80x128xi1>, vector<80x128xf32>
    %17 = arith.truncf %16 : vector<80x128xf32> to vector<80x128xbf16>
    %c0_3 = arith.constant 0 : index
    %c0_4 = arith.constant 0 : index
    %c0_5 = arith.constant 0 : index
    %18 = vector.load %arg2[%c0_3, %c0_4, %c0_5] : memref<5x64x80xbf16, #tpu.memory_space<vmem>>, vector<1x64x80xbf16>
    %19 = vector.shape_cast %18 : vector<1x64x80xbf16> to vector<64x80xbf16>
    %cst_6 = arith.constant dense<0.000000e+00> : vector<64x128xf32>
    %20 = tpu.matmul %19, %17, %cst_6 {dimension_numbers = #tpu.dot_dimension_numbers<[1], [0], [0], [1], [0, 0, 1, 1], [], []>} : vector<64x80xbf16>, vector<80x128xbf16>, vector<64x128xf32> -> vector<64x128xf32>
    %c1_i32 = arith.constant 1 : i32
    %21 = tpu.dynamic_rotate %1 by %c1_i32 dim 1 : vector<80x128xf32>, i32 -> vector<80x128xf32>
    %c-1_i32 = arith.constant -1 : i32
    %22 = vector.broadcast %c-1_i32 : i32 to vector<1x128xi32>
    %23 = arith.addi %2, %22 : vector<1x128xi32>
    %c0_i32_7 = arith.constant 0 : i32
    %24 = vector.broadcast %c0_i32_7 : i32 to vector<1x128xi32>
    %25 = arith.cmpi sge, %23, %24 : vector<1x128xi32>
    %c-1_i32_8 = arith.constant -1 : i32
    %26 = vector.broadcast %c-1_i32_8 : i32 to vector<1x128xi32>
    %27 = arith.addi %2, %26 : vector<1x128xi32>
    %c120_i32_9 = arith.constant 120 : i32
    %28 = vector.broadcast %c120_i32_9 : i32 to vector<1x128xi32>
    %29 = arith.cmpi slt, %27, %28 : vector<1x128xi32>
    %30 = arith.andi %25, %29 : vector<1x128xi1>
    %cst_10 = arith.constant 0.000000e+00 : f32
    %31 = vector.shape_cast %30 : vector<1x128xi1> to vector<1x128xi1>
    %32 = vector.broadcast %31 : vector<1x128xi1> to vector<80x128xi1>
    %33 = vector.broadcast %cst_10 : f32 to vector<80x128xf32>
    %34 = arith.select %32, %21, %33 : vector<80x128xi1>, vector<80x128xf32>
    %35 = arith.truncf %34 : vector<80x128xf32> to vector<80x128xbf16>
    %c1 = arith.constant 1 : index
    %c0_11 = arith.constant 0 : index
    %c0_12 = arith.constant 0 : index
    %36 = vector.load %arg2[%c1, %c0_11, %c0_12] : memref<5x64x80xbf16, #tpu.memory_space<vmem>>, vector<1x64x80xbf16>
    %37 = vector.shape_cast %36 : vector<1x64x80xbf16> to vector<64x80xbf16>
    %cst_13 = arith.constant dense<0.000000e+00> : vector<64x128xf32>
    %38 = tpu.matmul %37, %35, %cst_13 {dimension_numbers = #tpu.dot_dimension_numbers<[1], [0], [0], [1], [0, 0, 1, 1], [], []>} : vector<64x80xbf16>, vector<80x128xbf16>, vector<64x128xf32> -> vector<64x128xf32>
    %39 = arith.addf %20, %38 : vector<64x128xf32>
    %40 = arith.truncf %1 : vector<80x128xf32> to vector<80x128xbf16>
    %c2 = arith.constant 2 : index
    %c0_14 = arith.constant 0 : index
    %c0_15 = arith.constant 0 : index
    %41 = vector.load %arg2[%c2, %c0_14, %c0_15] : memref<5x64x80xbf16, #tpu.memory_space<vmem>>, vector<1x64x80xbf16>
    %42 = vector.shape_cast %41 : vector<1x64x80xbf16> to vector<64x80xbf16>
    %cst_16 = arith.constant dense<0.000000e+00> : vector<64x128xf32>
    %43 = tpu.matmul %42, %40, %cst_16 {dimension_numbers = #tpu.dot_dimension_numbers<[1], [0], [0], [1], [0, 0, 1, 1], [], []>} : vector<64x80xbf16>, vector<80x128xbf16>, vector<64x128xf32> -> vector<64x128xf32>
    %44 = arith.addf %39, %43 : vector<64x128xf32>
    %c127_i32 = arith.constant 127 : i32
    %45 = tpu.dynamic_rotate %1 by %c127_i32 dim 1 : vector<80x128xf32>, i32 -> vector<80x128xf32>
    %c1_i32_17 = arith.constant 1 : i32
    %46 = vector.broadcast %c1_i32_17 : i32 to vector<1x128xi32>
    %47 = arith.addi %2, %46 : vector<1x128xi32>
    %c0_i32_18 = arith.constant 0 : i32
    %48 = vector.broadcast %c0_i32_18 : i32 to vector<1x128xi32>
    %49 = arith.cmpi sge, %47, %48 : vector<1x128xi32>
    %c1_i32_19 = arith.constant 1 : i32
    %50 = vector.broadcast %c1_i32_19 : i32 to vector<1x128xi32>
    %51 = arith.addi %2, %50 : vector<1x128xi32>
    %c120_i32_20 = arith.constant 120 : i32
    %52 = vector.broadcast %c120_i32_20 : i32 to vector<1x128xi32>
    %53 = arith.cmpi slt, %51, %52 : vector<1x128xi32>
    %54 = arith.andi %49, %53 : vector<1x128xi1>
    %cst_21 = arith.constant 0.000000e+00 : f32
    %55 = vector.shape_cast %54 : vector<1x128xi1> to vector<1x128xi1>
    %56 = vector.broadcast %55 : vector<1x128xi1> to vector<80x128xi1>
    %57 = vector.broadcast %cst_21 : f32 to vector<80x128xf32>
    %58 = arith.select %56, %45, %57 : vector<80x128xi1>, vector<80x128xf32>
    %59 = arith.truncf %58 : vector<80x128xf32> to vector<80x128xbf16>
    %c3 = arith.constant 3 : index
    %c0_22 = arith.constant 0 : index
    %c0_23 = arith.constant 0 : index
    %60 = vector.load %arg2[%c3, %c0_22, %c0_23] : memref<5x64x80xbf16, #tpu.memory_space<vmem>>, vector<1x64x80xbf16>
    %61 = vector.shape_cast %60 : vector<1x64x80xbf16> to vector<64x80xbf16>
    %cst_24 = arith.constant dense<0.000000e+00> : vector<64x128xf32>
    %62 = tpu.matmul %61, %59, %cst_24 {dimension_numbers = #tpu.dot_dimension_numbers<[1], [0], [0], [1], [0, 0, 1, 1], [], []>} : vector<64x80xbf16>, vector<80x128xbf16>, vector<64x128xf32> -> vector<64x128xf32>
    %63 = arith.addf %44, %62 : vector<64x128xf32>
    %c126_i32 = arith.constant 126 : i32
    %64 = tpu.dynamic_rotate %1 by %c126_i32 dim 1 : vector<80x128xf32>, i32 -> vector<80x128xf32>
    %c2_i32_25 = arith.constant 2 : i32
    %65 = vector.broadcast %c2_i32_25 : i32 to vector<1x128xi32>
    %66 = arith.addi %2, %65 : vector<1x128xi32>
    %c0_i32_26 = arith.constant 0 : i32
    %67 = vector.broadcast %c0_i32_26 : i32 to vector<1x128xi32>
    %68 = arith.cmpi sge, %66, %67 : vector<1x128xi32>
    %c2_i32_27 = arith.constant 2 : i32
    %69 = vector.broadcast %c2_i32_27 : i32 to vector<1x128xi32>
    %70 = arith.addi %2, %69 : vector<1x128xi32>
    %c120_i32_28 = arith.constant 120 : i32
    %71 = vector.broadcast %c120_i32_28 : i32 to vector<1x128xi32>
    %72 = arith.cmpi slt, %70, %71 : vector<1x128xi32>
    %73 = arith.andi %68, %72 : vector<1x128xi1>
    %cst_29 = arith.constant 0.000000e+00 : f32
    %74 = vector.shape_cast %73 : vector<1x128xi1> to vector<1x128xi1>
    %75 = vector.broadcast %74 : vector<1x128xi1> to vector<80x128xi1>
    %76 = vector.broadcast %cst_29 : f32 to vector<80x128xf32>
    %77 = arith.select %75, %64, %76 : vector<80x128xi1>, vector<80x128xf32>
    %78 = arith.truncf %77 : vector<80x128xf32> to vector<80x128xbf16>
    %c4 = arith.constant 4 : index
    %c0_30 = arith.constant 0 : index
    %c0_31 = arith.constant 0 : index
    %79 = vector.load %arg2[%c4, %c0_30, %c0_31] : memref<5x64x80xbf16, #tpu.memory_space<vmem>>, vector<1x64x80xbf16>
    %80 = vector.shape_cast %79 : vector<1x64x80xbf16> to vector<64x80xbf16>
    %cst_32 = arith.constant dense<0.000000e+00> : vector<64x128xf32>
    %81 = tpu.matmul %80, %78, %cst_32 {dimension_numbers = #tpu.dot_dimension_numbers<[1], [0], [0], [1], [0, 0, 1, 1], [], []>} : vector<64x80xbf16>, vector<80x128xbf16>, vector<64x128xf32> -> vector<64x128xf32>
    %82 = arith.addf %63, %81 : vector<64x128xf32>
    %c0_33 = arith.constant 0 : index
    %c0_34 = arith.constant 0 : index
    %83 = vector.load %arg3[%c0_33, %c0_34] : memref<64x3xf32, #tpu.memory_space<vmem>>, vector<64x3xf32>
    %84 = vector.extract_strided_slice %83 {offsets = [0, 0], sizes = [64, 1], strides = [1, 1]} : vector<64x3xf32> to vector<64x1xf32>
    %85 = vector.broadcast %84 : vector<64x1xf32> to vector<64x128xf32>
    %86 = arith.addf %82, %85 : vector<64x128xf32>
    %cst_35 = arith.constant 0.000000e+00 : f32
    %87 = vector.broadcast %cst_35 : f32 to vector<64x128xf32>
    %88 = arith.maximumf %86, %87 : vector<64x128xf32>
    %89 = vector.extract_strided_slice %83 {offsets = [0, 1], sizes = [64, 1], strides = [1, 1]} : vector<64x3xf32> to vector<64x1xf32>
    %90 = vector.broadcast %89 : vector<64x1xf32> to vector<64x128xf32>
    %91 = arith.mulf %88, %90 : vector<64x128xf32>
    %92 = vector.extract_strided_slice %83 {offsets = [0, 2], sizes = [64, 1], strides = [1, 1]} : vector<64x3xf32> to vector<64x1xf32>
    %93 = vector.broadcast %92 : vector<64x1xf32> to vector<64x128xf32>
    %94 = arith.addf %91, %93 : vector<64x128xf32>
    %95 = arith.truncf %94 : vector<64x128xf32> to vector<64x128xbf16>
    %c0_36 = arith.constant 0 : index
    %c0_37 = arith.constant 0 : index
    %c0_38 = arith.constant 0 : index
    %96 = vector.load %arg4[%c0_36, %c0_37, %c0_38] : memref<1x64x128xbf16, #tpu.memory_space<vmem>>, vector<1x64x128xbf16>
    %97 = vector.shape_cast %96 : vector<1x64x128xbf16> to vector<64x128xbf16>
    %98 = vector.shape_cast %95 : vector<64x128xbf16> to vector<1x64x128xbf16>
    tpu.vector_store %arg4[%c0_36, %c0_37, %c0_38], %98 {strides = array<i32>} : memref<1x64x128xbf16, #tpu.memory_space<vmem>>, vector<1x64x128xbf16>,
    return
  }
  func.func @transform_0(%arg0: i32) -> (i32, i32, i32) {
    %c0_i32 = arith.constant 0 : i32
    %c0_i32_0 = arith.constant 0 : i32
    %c0_i32_1 = arith.constant 0 : i32
    return %arg0, %c0_i32, %c0_i32_0 : i32, i32, i32
  }
  func.func @transform_1(%arg0: i32) -> (i32, i32, i32) {
    %c0_i32 = arith.constant 0 : i32
    %c0_i32_0 = arith.constant 0 : i32
    %c0_i32_1 = arith.constant 0 : i32
    %c0_i32_2 = arith.constant 0 : i32
    return %c0_i32, %c0_i32_0, %c0_i32_1 : i32, i32, i32
  }
  func.func @transform_2(%arg0: i32) -> (i32, i32) {
    %c0_i32 = arith.constant 0 : i32
    %c0_i32_0 = arith.constant 0 : i32
    %c0_i32_1 = arith.constant 0 : i32
    return %c0_i32, %c0_i32_0 : i32, i32
  }
  func.func @transform_3(%arg0: i32) -> (i32, i32, i32) {
    %c0_i32 = arith.constant 0 : i32
    %c0_i32_0 = arith.constant 0 : i32
    %c0_i32_1 = arith.constant 0 : i32
    return %arg0, %c0_i32, %c0_i32_0 : i32, i32, i32
  }
}

</mosaic_0001>

<llo_original>
// kernel: tpu_custom_call.1
$region0: #{tpu_custom_call.1}
  #allocation0 [shape = 'u32[]', space=smem, size = 0x4, offset = 0x4, fixed_abs, tag = 'smem constant byte address 0x4 - core index']
  #allocation1 [shape = 'u32[72,128]{1,0:T(1,128)}', space=vmem, size = 0x9000, scoped, tag = 'internal scratch']
  %s0 = inlined_call_operand.hbm [shape: f32[8,128], index: 0, kind: input, shape index: {}]
  %s1 = inlined_call_operand.hbm [shape: f32[8,128], index: 1, kind: output, shape index: {}]
  %s2 = sld [smem:[#allocation0]]
  $region41: #{tpu_custom_call.1} parent=0
    _
  %s4 = ssub.s32 1, %s2
  %s5 = scalar_select 0, %s4, %s2
  $region1: #{tpu_custom_call.1} parent=0
    #allocation2 [shape = 'u8[4096]{0}', space=vmem, size = 0x1000, scoped, tag = 'input window, operand 0, single buffered']
    #allocation3 [shape = 's32[2]{0}', space=sflag, size = 0x8, scoped, tag = 'scoped memory for tpu_custom_call.1']
    #allocation4 [shape = 's32[2]{0}', space=sflag, size = 0x8, scoped, tag = 'scoped memory for tpu_custom_call.1']
    #allocation5 [shape = 'u8[4096]{0}', space=vmem, size = 0x1000, scoped, tag = 'output window, operand 0, single buffered']
    %6 = vsyncpa [#allocation3], 0
    %7 = vsyncpa [#allocation4], 0
    loop: start=0, step=1, limit=4
    $region2: #{tpu_custom_call.1} parent=1 // loop_pre_header
      _
    $region3: #{tpu_custom_call.1} parent=1 // loop_header
      %s9 = sphi 0, %s13
      %p10 = scmp.ge.s32.totalorder %s9, 4
      %s17 = sphi 0, %s17
      %s19 = sphi 0, %s17
      %s20 = sphi 0, %s19
      %s34 = sphi 0, %s20
      %s38 = sphi 0, %s38
      %s40 = sphi 0, %s38
      %s41 = sphi 0, %s40
      %s55 = sphi 0, %s41
    $region4: #{tpu_custom_call.1} parent=1 // loop_header_branch
      %12 = sbr.rel (%p10) target = $region8
    $region5: #{tpu_custom_call.1} parent=1 // loop_body
      %s14 = ssub.s32 %s9, 1
      %s15 = ssub.s32 %s9, 2
      %s16 = sadd.s32 %s9, 1
      %s18 = sadd.s32 %s17, 1
      %p21 = scmp.eq.s32.totalorder %s9, 1
      %p22 = scmp.ne.s32.totalorder %s17, %s19
      %p23 = scmp.eq.s32.totalorder %s9, 0
      %p24 = por %p22, %p23
      %p25 = scmp.ne.s32.totalorder %s17, %s19
      %p26 = scmp.eq.s32.totalorder %s14, 1
      %p27 = por %p25, %p26
      %p28 = scmp.ne.s32.totalorder %s19, %s20
      %p29 = scmp.eq.s32.totalorder %s14, 0
      %p30 = por %p28, %p29
      %p31 = scmp.ne.s32.totalorder %s19, %s20
      %p32 = scmp.eq.s32.totalorder %s15, 1
      %p33 = por %p31, %p32
      %p35 = scmp.ne.s32.totalorder %s20, %s34
      %p36 = scmp.eq.s32.totalorder %s15, 0
      %p37 = por %p35, %p36
      %s39 = sadd.s32 %s38, 1
      %p42 = scmp.eq.s32.totalorder %s9, 1
      %p43 = scmp.ne.s32.totalorder %s38, %s40
      %p44 = scmp.eq.s32.totalorder %s9, 0
      %p45 = por %p43, %p44
      %p46 = scmp.ne.s32.totalorder %s38, %s40
      %p47 = scmp.eq.s32.totalorder %s14, 1
      %p48 = por %p46, %p47
      %p49 = scmp.ne.s32.totalorder %s40, %s41
      %p50 = scmp.eq.s32.totalorder %s14, 0
      %p51 = por %p49, %p50
      %p52 = scmp.ne.s32.totalorder %s40, %s41
      %p53 = scmp.eq.s32.totalorder %s15, 1
      %p54 = por %p52, %p53
      %p56 = scmp.ne.s32.totalorder %s41, %s55
      %p57 = scmp.eq.s32.totalorder %s15, 0
      %p58 = por %p56, %p57
      %p59 = scmp.le.s32.totalorder 1, %s9
      %p60 = scmp.lt.s32.totalorder %s9, 3
      %p61 = pnand %p59, %p60
      %p62 = pneg %p61
      // Predicated region
      $region9: #{tpu_custom_call.1} parent=5 // pred_check
        _
      $region10: #{tpu_custom_call.1} parent=5 // pred_check_branch
        %64 = sbr.rel (%p61) target = $region12
      $region11: #{tpu_custom_call.1} parent=5 // pred_region
        %s65 = ssub.s32 %s9, 1
        // Predicated region
        $region13: #{tpu_custom_call.1} parent=11 // pred_check
          %p66 = pneg %p30
        $region14: #{tpu_custom_call.1} parent=11 // pred_check_branch
          %68 = sbr.rel (%p66) target = $region16
        $region15: #{tpu_custom_call.1} parent=11 // pred_region
          %70 = vsyncadd [#allocation3], 0
          %s72 = sshll.u32 %s0, 4
          %s73 = int_to_ptr.hbm [resolvable:$true] %s72
          %s74 = sshll.u32 [#allocation2], 4
          %s75 = int_to_ptr.vmem [resolvable:$true] %s74
          %77 = dma.hbm_to_vmem [thread:$0]  %s73, 128, %s75, [#allocation3]
        $region16: #{tpu_custom_call.1} parent=11 // pred_fallthru
          _
      $region12: #{tpu_custom_call.1} parent=5 // pred_fallthru
        _
      %p78 = scmp.lt.s32.totalorder %s9, 2
      // Predicated region
      $region17: #{tpu_custom_call.1} parent=5 // pred_check
        %p79 = pneg %p78
      $region18: #{tpu_custom_call.1} parent=5 // pred_check_branch
        %81 = sbr.rel (%p79) target = $region20
      $region19: #{tpu_custom_call.1} parent=5 // pred_region
        _
      $region20: #{tpu_custom_call.1} parent=5 // pred_fallthru
        _
      %p82 = scmp.le.s32.totalorder 1, %s9
      %p83 = scmp.lt.s32.totalorder %s9, 3
      %p84 = pnand %p82, %p83
      %p85 = pneg %p84
      // Predicated region
      $region21: #{tpu_custom_call.1} parent=5 // pred_check
        _
      $region22: #{tpu_custom_call.1} parent=5 // pred_check_branch
        %87 = sbr.rel (%p84) target = $region24
      $region23: #{tpu_custom_call.1} parent=5 // pred_region
        %s88 = ssub.s32 %s9, 1
        // Predicated region
        $region25: #{tpu_custom_call.1} parent=23 // pred_check
          %p89 = pneg %p30
        $region26: #{tpu_custom_call.1} parent=23 // pred_check_branch
          %91 = sbr.rel (%p89) target = $region28
        $region27: #{tpu_custom_call.1} parent=23 // pred_region
          %93 = dma.done [#allocation3], 128
        $region28: #{tpu_custom_call.1} parent=23 // pred_fallthru
          _
        %p94 = pneg %p30
        %p95 = pneg %p27
        %p96 = pneg %p51
        %p97 = pneg %p48
        %v98 = vld [vmem:[#allocation2] sm:$0xff]
        %v99 = vadd.f32 %v98, 1.0
        %100 = vst [vmem:[#allocation5] sm:$0xff] %v99
        // Predicated region
        $region29: #{tpu_custom_call.1} parent=23 // pred_check
          %p101 = pneg %p48
        $region30: #{tpu_custom_call.1} parent=23 // pred_check_branch
          %103 = sbr.rel (%p101) target = $region32
        $region31: #{tpu_custom_call.1} parent=23 // pred_region
          %105 = vsyncadd [#allocation4], 0
          %s107 = sshll.u32 [#allocation5], 4
          %s108 = int_to_ptr.vmem [resolvable:$true] %s107
          %s109 = sshll.u32 %s1, 4
          %s110 = int_to_ptr.hbm [resolvable:$true] %s109
          %112 = dma.vmem_to_hbm [thread:$0]  %s108, 128, %s110, [#allocation4]
        $region32: #{tpu_custom_call.1} parent=23 // pred_fallthru
          _
        // Predicated region
        $region33: #{tpu_custom_call.1} parent=23 // pred_check
          %p113 = pneg %p48
        $region34: #{tpu_custom_call.1} parent=23 // pred_check_branch
          %115 = sbr.rel (%p113) target = $region36
        $region35: #{tpu_custom_call.1} parent=23 // pred_region
          %117 = dma.done [#allocation4], 128
        $region36: #{tpu_custom_call.1} parent=23 // pred_fallthru
          _
      $region24: #{tpu_custom_call.1} parent=5 // pred_fallthru
        _
      %p118 = scmp.le.s32.totalorder 2, %s9
      // Predicated region
      $region37: #{tpu_custom_call.1} parent=5 // pred_check
        %p119 = pneg %p118
      $region38: #{tpu_custom_call.1} parent=5 // pred_check_branch
        %121 = sbr.rel (%p119) target = $region40
      $region39: #{tpu_custom_call.1} parent=5 // pred_region
        %s122 = ssub.s32 %s9, 2
      $region40: #{tpu_custom_call.1} parent=5 // pred_fallthru
        _
    $region6: #{tpu_custom_call.1} parent=1 // loop_footer
      %s13 = sadd.s32 1, %s9
    $region7: #{tpu_custom_call.1} parent=1 // loop_footer_branch
      %8 = sbr.rel target = $region3
    $region8: #{tpu_custom_call.1} parent=1 // loop_exit
      _
    %123 = vsyncpa [#allocation3], 1
    %s124 = scalar_lea.sflag [#allocation3], 1
    %125 = vsyncpa %s124, 1
    %126 = vsyncpa [#allocation4], 1
    %s127 = scalar_lea.sflag [#allocation4], 1
    %128 = vsyncpa %s127, 1

// kernel: tpu_custom_call.1
$region0: #{tpu_custom_call.1}
  #allocation0 [shape = 'u32[]', space=smem, size = 0x4, offset = 0x4, fixed_abs, tag = 'smem constant byte address 0x4 - core index']
  #allocation1 [shape = 'u32[72,128]{1,0:T(1,128)}', space=vmem, size = 0x9000, scoped, tag = 'internal scratch']
  %s0 = inlined_call_operand.hbm [shape: f32[2,80,128], index: 0, kind: input, shape index: {}]
  %s1 = inlined_call_operand.hbm [shape: bf16[5,64,80], index: 1, kind: input, shape index: {}]
  %s2 = inlined_call_operand.vmem [shape: f32[64,3], index: 2, kind: input, shape index: {}]
  %s3 = inlined_call_operand.hbm [shape: bf16[2,64,128], index: 3, kind: output, shape index: {}]
  %s4 = sld [smem:[#allocation0]]
  $region53: #{tpu_custom_call.1} parent=0
    _
  %s6 = ssub.s32 1, %s4
  %s7 = scalar_select 0, %s6, %s4
  $region1: #{tpu_custom_call.1} parent=0
    #allocation2 [shape = 'u8[81920]{0}', space=vmem, size = 0x14000, scoped, tag = 'input window, operand 0']
    #allocation3 [shape = 's32[2]{0}', space=sflag, size = 0x8, scoped, tag = 'scoped memory for tpu_custom_call.1']
    #allocation4 [shape = 's32[2]{0}', space=sflag, size = 0x8, scoped, tag = 'scoped memory for tpu_custom_call.1']
    #allocation5 [shape = 'u8[81920]{0}', space=vmem, size = 0x14000, scoped, tag = 'input window, operand 1, single buffered']
    #allocation6 [shape = 's32[1]{0}', space=sflag, size = 0x4, scoped, tag = 'scoped memory for tpu_custom_call.1']
    #allocation7 [shape = 'u8[32768]{0}', space=vmem, size = 0x8000, scoped, tag = 'output window, operand 0']
    %8 = vsyncpa [#allocation3], 0
    %s9 = scalar_lea.sflag [#allocation3], 1
    %10 = vsyncpa %s9, 0
    %11 = vsyncpa [#allocation6], 0
    %12 = vsyncpa [#allocation4], 0
    %s13 = scalar_lea.sflag [#allocation4], 1
    %14 = vsyncpa %s13, 0
    loop: start=0, step=1, limit=4
    $region2: #{tpu_custom_call.1} parent=1 // loop_pre_header
      _
    $region3: #{tpu_custom_call.1} parent=1 // loop_header
      %s16 = sphi 0, %s20
      %p17 = scmp.ge.s32.totalorder %s16, 4
      %s26 = sphi 0, %s28
      %s29 = sphi 0, %s26
      %s30 = sphi 0, %s29
      %s46 = sphi 0, %s30
      %s50 = sphi 0, %s50
      %s52 = sphi 0, %s50
      %s53 = sphi 0, %s52
      %s67 = sphi 0, %s53
      %s71 = sphi 0, %s71
      %s73 = sphi 0, %s71
      %s74 = sphi 0, %s73
      %s88 = sphi 0, %s74
      %s94 = sphi 0, %s96
      %s97 = sphi 0, %s94
      %s98 = sphi 0, %s97
      %s114 = sphi 0, %s98
    $region4: #{tpu_custom_call.1} parent=1 // loop_header_branch
      %19 = sbr.rel (%p17) target = $region8
    $region5: #{tpu_custom_call.1} parent=1 // loop_body
      %s21 = ssub.s32 %s16, 1
      %s22 = ssub.s32 %s16, 2
      %s23 = sadd.s32 %s16, 1
      %s24 = ssub.s32 %s16, %s23
      %p25 = scmp.eq.s32.totalorder %s24, 0
      %s27 = sadd.s32 %s26, 1
      %s28 = scalar_select %p25, %s26, %s27
      %p31 = pneg %p25
      %p32 = scmp.eq.s32.totalorder %s16, 1
      %p33 = por %p31, %p32
      %p34 = scmp.ne.s32.totalorder %s26, %s29
      %p35 = scmp.eq.s32.totalorder %s16, 0
      %p36 = por %p34, %p35
      %p37 = scmp.ne.s32.totalorder %s26, %s29
      %p38 = scmp.eq.s32.totalorder %s21, 1
      %p39 = por %p37, %p38
      %p40 = scmp.ne.s32.totalorder %s29, %s30
      %p41 = scmp.eq.s32.totalorder %s21, 0
      %p42 = por %p40, %p41
      %p43 = scmp.ne.s32.totalorder %s29, %s30
      %p44 = scmp.eq.s32.totalorder %s22, 1
      %p45 = por %p43, %p44
      %p47 = scmp.ne.s32.totalorder %s30, %s46
      %p48 = scmp.eq.s32.totalorder %s22, 0
      %p49 = por %p47, %p48
      %s51 = sadd.s32 %s50, 1
      %p54 = scmp.eq.s32.totalorder %s16, 1
      %p55 = scmp.ne.s32.totalorder %s50, %s52
      %p56 = scmp.eq.s32.totalorder %s16, 0
      %p57 = por %p55, %p56
      %p58 = scmp.ne.s32.totalorder %s50, %s52
      %p59 = scmp.eq.s32.totalorder %s21, 1
      %p60 = por %p58, %p59
      %p61 = scmp.ne.s32.totalorder %s52, %s53
      %p62 = scmp.eq.s32.totalorder %s21, 0
      %p63 = por %p61, %p62
      %p64 = scmp.ne.s32.totalorder %s52, %s53
      %p65 = scmp.eq.s32.totalorder %s22, 1
      %p66 = por %p64, %p65
      %p68 = scmp.ne.s32.totalorder %s53, %s67
      %p69 = scmp.eq.s32.totalorder %s22, 0
      %p70 = por %p68, %p69
      %s72 = sadd.s32 %s71, 1
      %p75 = scmp.eq.s32.totalorder %s16, 1
      %p76 = scmp.ne.s32.totalorder %s71, %s73
      %p77 = scmp.eq.s32.totalorder %s16, 0
      %p78 = por %p76, %p77
      %p79 = scmp.ne.s32.totalorder %s71, %s73
      %p80 = scmp.eq.s32.totalorder %s21, 1
      %p81 = por %p79, %p80
      %p82 = scmp.ne.s32.totalorder %s73, %s74
      %p83 = scmp.eq.s32.totalorder %s21, 0
      %p84 = por %p82, %p83
      %p85 = scmp.ne.s32.totalorder %s73, %s74
      %p86 = scmp.eq.s32.totalorder %s22, 1
      %p87 = por %p85, %p86
      %p89 = scmp.ne.s32.totalorder %s74, %s88
      %p90 = scmp.eq.s32.totalorder %s22, 0
      %p91 = por %p89, %p90
      %s92 = ssub.s32 %s16, %s23
      %p93 = scmp.eq.s32.totalorder %s92, 0
      %s95 = sadd.s32 %s94, 1
      %s96 = scalar_select %p93, %s94, %s95
      %p99 = pneg %p93
      %p100 = scmp.eq.s32.totalorder %s16, 1
      %p101 = por %p99, %p100
      %p102 = scmp.ne.s32.totalorder %s94, %s97
      %p103 = scmp.eq.s32.totalorder %s16, 0
      %p104 = por %p102, %p103
      %p105 = scmp.ne.s32.totalorder %s94, %s97
      %p106 = scmp.eq.s32.totalorder %s21, 1
      %p107 = por %p105, %p106
      %p108 = scmp.ne.s32.totalorder %s97, %s98
      %p109 = scmp.eq.s32.totalorder %s21, 0
      %p110 = por %p108, %p109
      %p111 = scmp.ne.s32.totalorder %s97, %s98
      %p112 = scmp.eq.s32.totalorder %s22, 1
      %p113 = por %p111, %p112
      %p115 = scmp.ne.s32.totalorder %s98, %s114
      %p116 = scmp.eq.s32.totalorder %s22, 0
      %p117 = por %p115, %p116
      %p118 = scmp.le.s32.totalorder 1, %s16
      %p119 = scmp.lt.s32.totalorder %s16, 3
      %p120 = pnand %p118, %p119
      %p121 = pneg %p120
      // Predicated region
      $region9: #{tpu_custom_call.1} parent=5 // pred_check
        _
      $region10: #{tpu_custom_call.1} parent=5 // pred_check_branch
        %123 = sbr.rel (%p120) target = $region12
      $region11: #{tpu_custom_call.1} parent=5 // pred_region
        %s124 = ssub.s32 %s16, 1
        // Predicated region
        $region13: #{tpu_custom_call.1} parent=11 // pred_check
          %p125 = pneg %p63
        $region14: #{tpu_custom_call.1} parent=11 // pred_check_branch
          %127 = sbr.rel (%p125) target = $region16
        $region15: #{tpu_custom_call.1} parent=11 // pred_region
          %129 = vsyncadd [#allocation6], 0
          %s130 = sshll.u32 %s1, 4
          %s131 = int_to_ptr.hbm [resolvable:$true] %s130
          %s132 = sshll.u32 [#allocation5], 4
          %s133 = int_to_ptr.vmem [resolvable:$true] %s132
          %138 = dma.hbm_to_vmem [thread:$0]  %s131, 2560, %s133, [#allocation6], 64, 64, 4
        $region16: #{tpu_custom_call.1} parent=11 // pred_fallthru
          _
        // Predicated region
        $region17: #{tpu_custom_call.1} parent=11 // pred_check
          %p139 = pneg %p84
        $region18: #{tpu_custom_call.1} parent=11 // pred_check_branch
          %141 = sbr.rel (%p139) target = $region20
        $region19: #{tpu_custom_call.1} parent=11 // pred_region
          _
        $region20: #{tpu_custom_call.1} parent=11 // pred_fallthru
          _
      $region12: #{tpu_custom_call.1} parent=5 // pred_fallthru
        _
      %p142 = scmp.lt.s32.totalorder %s16, 2
      // Predicated region
      $region21: #{tpu_custom_call.1} parent=5 // pred_check
        %p143 = pneg %p142
      $region22: #{tpu_custom_call.1} parent=5 // pred_check_branch
        %145 = sbr.rel (%p143) target = $region24
      $region23: #{tpu_custom_call.1} parent=5 // pred_region
        // Predicated region
        $region25: #{tpu_custom_call.1} parent=23 // pred_check
          %p146 = pneg %p36
        $region26: #{tpu_custom_call.1} parent=23 // pred_check_branch
          %148 = sbr.rel (%p146) target = $region28
        $region27: #{tpu_custom_call.1} parent=23 // pred_region
          %s149 = sand.u32 %s26, 1
          %s150 = scalar_lea.sflag [#allocation3], %s149
          %s151 = sand.u32 %s26, 1
          %s152 = smul.addr %s151, 80
          %s153 = scalar_lea.vmem [#allocation2], %s152
          %155 = vsyncadd %s150, 0
          %s156 = smul.addr %s16, 10
          %s157 = smul.addr %s156, 8
          %s158 = scalar_lea.hbm %s0, %s157
          %s159 = sshll.u32 %s158, 4
          %s160 = int_to_ptr.hbm [resolvable:$true] %s159
          %s161 = sshll.u32 %s153, 4
          %s162 = int_to_ptr.vmem [resolvable:$true] %s161
          %167 = dma.hbm_to_vmem [thread:$0]  %s160, 1280, %s162, %s150, 128, 128, 8
        $region28: #{tpu_custom_call.1} parent=23 // pred_fallthru
          _
      $region24: #{tpu_custom_call.1} parent=5 // pred_fallthru
        _
      %p168 = scmp.le.s32.totalorder 1, %s16
      %p169 = scmp.lt.s32.totalorder %s16, 3
      %p170 = pnand %p168, %p169
      %p171 = pneg %p170
      // Predicated region
      $region29: #{tpu_custom_call.1} parent=5 // pred_check
        _
      $region30: #{tpu_custom_call.1} parent=5 // pred_check_branch
        %173 = sbr.rel (%p170) target = $region32
      $region31: #{tpu_custom_call.1} parent=5 // pred_region
        %s174 = ssub.s32 %s16, 1
        %s175 = sand.u32 %s29, 1
        %s176 = scalar_lea.sflag [#allocation3], %s175
        %s177 = sand.u32 %s29, 1
        %s178 = smul.addr %s177, 80
        %s179 = scalar_lea.vmem [#allocation2], %s178
        // Predicated region
        $region33: #{tpu_custom_call.1} parent=31 // pred_check
          %p180 = pneg %p42
        $region34: #{tpu_custom_call.1} parent=31 // pred_check_branch
          %182 = sbr.rel (%p180) target = $region36
        $region35: #{tpu_custom_call.1} parent=31 // pred_region
          %184 = dma.done %s176, 1280
        $region36: #{tpu_custom_call.1} parent=31 // pred_fallthru
          _
        // Predicated region
        $region37: #{tpu_custom_call.1} parent=31 // pred_check
          %p185 = pneg %p63
        $region38: #{tpu_custom_call.1} parent=31 // pred_check_branch
          %187 = sbr.rel (%p185) target = $region40
        $region39: #{tpu_custom_call.1} parent=31 // pred_region
          %189 = dma.done [#allocation6], 2560
        $region40: #{tpu_custom_call.1} parent=31 // pred_fallthru
          _
        %s190 = sand.u32 %s29, 1
        %s191 = scalar_lea.sflag [#allocation3], %s190
        %s192 = sand.u32 %s29, 1
        %s193 = smul.addr %s192, 80
        %s194 = scalar_lea.vmem [#allocation2], %s193
        %p195 = pneg %p42
        %p196 = pneg %p39
        %p197 = pneg %p63
        %p198 = pneg %p60
        %p199 = pneg %p84
        %p200 = pneg %p81
        %p201 = pneg %p110
        %p202 = pneg %p107
        %s203 = sand.u32 %s97, 1
        %s204 = scalar_lea.sflag [#allocation4], %s203
        %s205 = sand.u32 %s97, 1
        %s206 = smul.addr %s205, 32
        %s207 = scalar_lea.vmem [#allocation7], %s206
        %v209 = vld [vmem:[%s179] sm:$0xff]
        %v210 = vld [vmem:[%s179 + $0x8] sm:$0xff]
        %v211 = vld [vmem:[%s179 + $0x10] sm:$0xff]
        %v212 = vld [vmem:[%s179 + $0x18] sm:$0xff]
        %v213 = vld [vmem:[%s179 + $0x20] sm:$0xff]
        %v214 = vld [vmem:[%s179 + $0x28] sm:$0xff]
        %v215 = vld [vmem:[%s179 + $0x30] sm:$0xff]
        %v216 = vld [vmem:[%s179 + $0x38] sm:$0xff]
        %v217 = vld [vmem:[%s179 + $0x40] sm:$0xff]
        %v218 = vld [vmem:[%s179 + $0x48] sm:$0xff]
        %v219 = vlaneseq
        %v220 = vand.u32 %v219, 127
        %221 = vrot.lane.b32.xlu0 %v209, 2
        %v222 = vpop.permute.xlu0 %221
        %223 = vrot.lane.b32.xlu0 %v210, 2
        %v224 = vpop.permute.xlu0 %223
        %225 = vrot.lane.b32.xlu0 %v211, 2
        %v226 = vpop.permute.xlu0 %225
        %227 = vrot.lane.b32.xlu0 %v212, 2
        %v228 = vpop.permute.xlu0 %227
        %229 = vrot.lane.b32.xlu0 %v213, 2
        %v230 = vpop.permute.xlu0 %229
        %231 = vrot.lane.b32.xlu0 %v214, 2
        %v232 = vpop.permute.xlu0 %231
        %233 = vrot.lane.b32.xlu0 %v215, 2
        %v234 = vpop.permute.xlu0 %233
        %235 = vrot.lane.b32.xlu0 %v216, 2
        %v236 = vpop.permute.xlu0 %235
        %237 = vrot.lane.b32.xlu0 %v217, 2
        %v238 = vpop.permute.xlu0 %237
        %239 = vrot.lane.b32.xlu0 %v218, 2
        %v240 = vpop.permute.xlu0 %239
        %v241 = vadd.s32 %v220, 4294967294
        %vm242 = vcmp.ge.s32.totalorder %v241, 0
        %vm243 = vcmp.lt.s32.totalorder %v241, 120
        %vm244 = vmand %vm242, %vm243
        %v245 = vsel %vm244, 1, 0
        %vm246 = vcmp.eq.s32.totalorder %v245, 1
        %v247 = vsel %vm246, %v222, 0.0
        %v248 = vsel %vm246, %v224, 0.0
        %v249 = vsel %vm246, %v226, 0.0
        %v250 = vsel %vm246, %v228, 0.0
        %v251 = vsel %vm246, %v230, 0.0
        %v252 = vsel %vm246, %v232, 0.0
        %v253 = vsel %vm246, %v234, 0.0
        %v254 = vsel %vm246, %v236, 0.0
        %v255 = vsel %vm246, %v238, 0.0
        %v256 = vsel %vm246, %v240, 0.0
        %v257 = vpack.c.bf16 %v248, %v247
        %v258 = vpack.c.bf16 %v250, %v249
        %v259 = vpack.c.bf16 %v252, %v251
        %v260 = vpack.c.bf16 %v254, %v253
        %v261 = vpack.c.bf16 %v256, %v255
        %v262 = vld [vmem:[#allocation5] sm:$0xf]
        %v263 = vld [vmem:[#allocation5 + $0x4] sm:$0xf]
        %v264 = vld [vmem:[#allocation5 + $0x8] sm:$0xf]
        %v265 = vld [vmem:[#allocation5 + $0xc] sm:$0xf]
        %v266 = vld [vmem:[#allocation5 + $0x10] sm:$0xf]
        %v267 = vld [vmem:[#allocation5 + $0x14] sm:$0xf]
        %v268 = vld [vmem:[#allocation5 + $0x18] sm:$0xf]
        %v269 = vld [vmem:[#allocation5 + $0x1c] sm:$0xf]
        %270 = vrot.lane.b32.xlu0 %v209, 1
        %v271 = vpop.permute.xlu0 %270
        %272 = vrot.lane.b32.xlu0 %v210, 1
        %v273 = vpop.permute.xlu0 %272
        %274 = vrot.lane.b32.xlu0 %v211, 1
        %v275 = vpop.permute.xlu0 %274
        %276 = vrot.lane.b32.xlu0 %v212, 1
        %v277 = vpop.permute.xlu0 %276
        %278 = vrot.lane.b32.xlu0 %v213, 1
        %v279 = vpop.permute.xlu0 %278
        %280 = vrot.lane.b32.xlu0 %v214, 1
        %v281 = vpop.permute.xlu0 %280
        %282 = vrot.lane.b32.xlu0 %v215, 1
        %v283 = vpop.permute.xlu0 %282
        %284 = vrot.lane.b32.xlu0 %v216, 1
        %v285 = vpop.permute.xlu0 %284
        %286 = vrot.lane.b32.xlu0 %v217, 1
        %v287 = vpop.permute.xlu0 %286
        %288 = vrot.lane.b32.xlu0 %v218, 1
        %v289 = vpop.permute.xlu0 %288
        %v290 = vadd.s32 %v220, 4294967295
        %vm291 = vcmp.ge.s32.totalorder %v290, 0
        %vm292 = vcmp.lt.s32.totalorder %v290, 120
        %vm293 = vmand %vm291, %vm292
        %v294 = vsel %vm293, 1, 0
        %vm295 = vcmp.eq.s32.totalorder %v294, 1
        %v296 = vsel %vm295, %v271, 0.0
        %v297 = vsel %vm295, %v273, 0.0
        %v298 = vsel %vm295, %v275, 0.0
        %v299 = vsel %vm295, %v277, 0.0
        %v300 = vsel %vm295, %v279, 0.0
        %v301 = vsel %vm295, %v281, 0.0
        %v302 = vsel %vm295, %v283, 0.0
        %v303 = vsel %vm295, %v285, 0.0
        %v304 = vsel %vm295, %v287, 0.0
        %v305 = vsel %vm295, %v289, 0.0
        %v306 = vpack.c.bf16 %v297, %v296
        %v307 = vpack.c.bf16 %v299, %v298
        %v308 = vpack.c.bf16 %v301, %v300
        %v309 = vpack.c.bf16 %v303, %v302
        %v310 = vpack.c.bf16 %v305, %v304
        %s311 = scalar_lea.vmem [#allocation5], 32
        %v312 = vld [vmem:[%s311] sm:$0xf]
        %v313 = vld [vmem:[%s311 + $0x4] sm:$0xf]
        %v314 = vld [vmem:[%s311 + $0x8] sm:$0xf]
        %v315 = vld [vmem:[%s311 + $0xc] sm:$0xf]
        %v316 = vld [vmem:[%s311 + $0x10] sm:$0xf]
        %v317 = vld [vmem:[%s311 + $0x14] sm:$0xf]
        %v318 = vld [vmem:[%s311 + $0x18] sm:$0xf]
        %v319 = vld [vmem:[%s311 + $0x1c] sm:$0xf]
        %v328 = vunpack.c.l.b16 %v312
        %v329 = vunpack.c.l.b16 %v313
        %v330 = vunpack.c.l.b16 %v314
        %v331 = vunpack.c.l.b16 %v315
        %v332 = vunpack.c.l.b16 %v316
        %v333 = vunpack.c.l.b16 %v317
        %v334 = vunpack.c.l.b16 %v318
        %v335 = vunpack.c.l.b16 %v319
        %v336 = vpack.c.b16 %v329, %v328
        %v337 = vpack.c.b16 %v331, %v330
        %v338 = vpack.c.b16 %v333, %v332
        %v339 = vpack.c.b16 %v335, %v334
        %vm340 = vcmask 654336
        %v342 = vsel %vm340, %v336, 0
        %v345 = vsel %vm340, %v337, 0
        %v348 = vsel %vm340, %v338, 0
        %v351 = vsel %vm340, %v339, 0
        %353 = vmatpush.bf16.msra.mxu0 0
        %354 = vmatpush.bf16.msra.mxu0 0
        %355 = vmatpush.bf16.msra.mxu0 0
        %356 = vmatpush.bf16.msra.mxu0 %v310
        %357 = vmatpush.bf16.msra.mxu0 %v309
        %358 = vmatpush.bf16.msra.mxu0 %v308
        %359 = vmatpush.bf16.msra.mxu0 %v307
        %360 = vmatpush.bf16.msra.mxu0 %v306
        %361 = vmatmul.bf16.gmra.mxu0 %v342
        %v362 = vpop.f32.mrf.mxu0
        %v363 = vadd.f32 0.0, %v362
        %v364 = vpop.f32.mrf.mxu0
        %v365 = vadd.f32 0.0, %v364
        %366 = vmatmul.bf16.gmra.mxu0 %v345
        %v367 = vpop.f32.mrf.mxu0
        %v368 = vadd.f32 0.0, %v367
        %v369 = vpop.f32.mrf.mxu0
        %v370 = vadd.f32 0.0, %v369
        %371 = vmatmul.bf16.gmra.mxu0 %v348
        %v372 = vpop.f32.mrf.mxu0
        %v373 = vadd.f32 0.0, %v372
        %v374 = vpop.f32.mrf.mxu0
        %v375 = vadd.f32 0.0, %v374
        %376 = vmatmul.bf16.gmra.mxu0 %v351
        %v377 = vpop.f32.mrf.mxu0
        %v378 = vadd.f32 0.0, %v377
        %v379 = vpop.f32.mrf.mxu0
        %v380 = vadd.f32 0.0, %v379
        %381 = vdwg.mxu0
        %v390 = vunpack.c.l.b16 %v262
        %v391 = vunpack.c.l.b16 %v263
        %v392 = vunpack.c.l.b16 %v264
        %v393 = vunpack.c.l.b16 %v265
        %v394 = vunpack.c.l.b16 %v266
        %v395 = vunpack.c.l.b16 %v267
        %v396 = vunpack.c.l.b16 %v268
        %v397 = vunpack.c.l.b16 %v269
        %v398 = vpack.c.b16 %v391, %v390
        %v399 = vpack.c.b16 %v393, %v392
        %v400 = vpack.c.b16 %v395, %v394
        %v401 = vpack.c.b16 %v397, %v396
        %v403 = vsel %vm340, %v398, 0
        %v406 = vsel %vm340, %v399, 0
        %v409 = vsel %vm340, %v400, 0
        %v412 = vsel %vm340, %v401, 0
        %414 = vmatpush.bf16.msra.mxu0 0
        %415 = vmatpush.bf16.msra.mxu0 0
        %416 = vmatpush.bf16.msra.mxu0 0
        %417 = vmatpush.bf16.msra.mxu0 %v261
        %418 = vmatpush.bf16.msra.mxu0 %v260
        %419 = vmatpush.bf16.msra.mxu0 %v259
        %420 = vmatpush.bf16.msra.mxu0 %v258
        %421 = vmatpush.bf16.msra.mxu0 %v257
        %422 = vmatmul.bf16.gmra.mxu0 %v403
        %v423 = vpop.f32.mrf.mxu0
        %v424 = vadd.f32 %v363, %v423
        %v425 = vpop.f32.mrf.mxu0
        %v426 = vadd.f32 %v365, %v425
        %427 = vmatmul.bf16.gmra.mxu0 %v406
        %v428 = vpop.f32.mrf.mxu0
        %v429 = vadd.f32 %v368, %v428
        %v430 = vpop.f32.mrf.mxu0
        %v431 = vadd.f32 %v370, %v430
        %432 = vmatmul.bf16.gmra.mxu0 %v409
        %v433 = vpop.f32.mrf.mxu0
        %v434 = vadd.f32 %v373, %v433
        %v435 = vpop.f32.mrf.mxu0
        %v436 = vadd.f32 %v375, %v435
        %437 = vmatmul.bf16.gmra.mxu0 %v412
        %v438 = vpop.f32.mrf.mxu0
        %v439 = vadd.f32 %v378, %v438
        %v440 = vpop.f32.mrf.mxu0
        %v441 = vadd.f32 %v380, %v440
        %442 = vdwg.mxu0
        %v443 = vpack.c.bf16 %v210, %v209
        %v444 = vpack.c.bf16 %v212, %v211
        %v445 = vpack.c.bf16 %v214, %v213
        %v446 = vpack.c.bf16 %v216, %v215
        %v447 = vpack.c.bf16 %v218, %v217
        %s448 = scalar_lea.vmem [#allocation5], 64
        %v449 = vld [vmem:[%s448] sm:$0xf]
        %v450 = vld [vmem:[%s448 + $0x4] sm:$0xf]
        %v451 = vld [vmem:[%s448 + $0x8] sm:$0xf]
        %v452 = vld [vmem:[%s448 + $0xc] sm:$0xf]
        %v453 = vld [vmem:[%s448 + $0x10] sm:$0xf]
        %v454 = vld [vmem:[%s448 + $0x14] sm:$0xf]
        %v455 = vld [vmem:[%s448 + $0x18] sm:$0xf]
        %v456 = vld [vmem:[%s448 + $0x1c] sm:$0xf]
        %v465 = vunpack.c.l.b16 %v449
        %v466 = vunpack.c.l.b16 %v450
        %v467 = vunpack.c.l.b16 %v451
        %v468 = vunpack.c.l.b16 %v452
        %v469 = vunpack.c.l.b16 %v453
        %v470 = vunpack.c.l.b16 %v454
        %v471 = vunpack.c.l.b16 %v455
        %v472 = vunpack.c.l.b16 %v456
        %v473 = vpack.c.b16 %v466, %v465
        %v474 = vpack.c.b16 %v468, %v467
        %v475 = vpack.c.b16 %v470, %v469
        %v476 = vpack.c.b16 %v472, %v471
        %v478 = vsel %vm340, %v473, 0
        %v481 = vsel %vm340, %v474, 0
        %v484 = vsel %vm340, %v475, 0
        %v487 = vsel %vm340, %v476, 0
        %489 = vmatpush.bf16.msra.mxu0 0
        %490 = vmatpush.bf16.msra.mxu0 0
        %491 = vmatpush.bf16.msra.mxu0 0
        %492 = vmatpush.bf16.msra.mxu0 %v447
        %493 = vmatpush.bf16.msra.mxu0 %v446
        %494 = vmatpush.bf16.msra.mxu0 %v445
        %495 = vmatpush.bf16.msra.mxu0 %v444
        %496 = vmatpush.bf16.msra.mxu0 %v443
        %497 = vmatmul.bf16.gmra.mxu0 %v478
        %v498 = vpop.f32.mrf.mxu0
        %v499 = vadd.f32 0.0, %v498
        %v500 = vpop.f32.mrf.mxu0
        %v501 = vadd.f32 0.0, %v500
        %502 = vmatmul.bf16.gmra.mxu0 %v481
        %v503 = vpop.f32.mrf.mxu0
        %v504 = vadd.f32 0.0, %v503
        %v505 = vpop.f32.mrf.mxu0
        %v506 = vadd.f32 0.0, %v505
        %507 = vmatmul.bf16.gmra.mxu0 %v484
        %v508 = vpop.f32.mrf.mxu0
        %v509 = vadd.f32 0.0, %v508
        %v510 = vpop.f32.mrf.mxu0
        %v511 = vadd.f32 0.0, %v510
        %512 = vmatmul.bf16.gmra.mxu0 %v487
        %v513 = vpop.f32.mrf.mxu0
        %v514 = vadd.f32 0.0, %v513
        %v515 = vpop.f32.mrf.mxu0
        %v516 = vadd.f32 0.0, %v515
        %517 = vdwg.mxu0
        %v518 = vadd.f32 %v424, %v499
        %v519 = vadd.f32 %v426, %v501
        %v520 = vadd.f32 %v429, %v504
        %v521 = vadd.f32 %v431, %v506
        %v522 = vadd.f32 %v434, %v509
        %v523 = vadd.f32 %v436, %v511
        %v524 = vadd.f32 %v439, %v514
        %v525 = vadd.f32 %v441, %v516
        %526 = vrot.lane.b32.xlu0 %v209, 127
        %v527 = vpop.permute.xlu0 %526
        %528 = vrot.lane.b32.xlu0 %v210, 127
        %v529 = vpop.permute.xlu0 %528
        %530 = vrot.lane.b32.xlu0 %v211, 127
        %v531 = vpop.permute.xlu0 %530
        %532 = vrot.lane.b32.xlu0 %v212, 127
        %v533 = vpop.permute.xlu0 %532
        %534 = vrot.lane.b32.xlu0 %v213, 127
        %v535 = vpop.permute.xlu0 %534
        %536 = vrot.lane.b32.xlu0 %v214, 127
        %v537 = vpop.permute.xlu0 %536
        %538 = vrot.lane.b32.xlu0 %v215, 127
        %v539 = vpop.permute.xlu0 %538
        %540 = vrot.lane.b32.xlu0 %v216, 127
        %v541 = vpop.permute.xlu0 %540
        %542 = vrot.lane.b32.xlu0 %v217, 127
        %v543 = vpop.permute.xlu0 %542
        %544 = vrot.lane.b32.xlu0 %v218, 127
        %v545 = vpop.permute.xlu0 %544
        %v546 = vadd.s32 %v220, 1
        %vm547 = vcmp.ge.s32.totalorder %v546, 0
        %vm548 = vcmp.lt.s32.totalorder %v546, 120
        %vm549 = vmand %vm547, %vm548
        %v550 = vsel %vm549, 1, 0
        %vm551 = vcmp.eq.s32.totalorder %v550, 1
        %v552 = vsel %vm551, %v527, 0.0
        %v553 = vsel %vm551, %v529, 0.0
        %v554 = vsel %vm551, %v531, 0.0
        %v555 = vsel %vm551, %v533, 0.0
        %v556 = vsel %vm551, %v535, 0.0
        %v557 = vsel %vm551, %v537, 0.0
        %v558 = vsel %vm551, %v539, 0.0
        %v559 = vsel %vm551, %v541, 0.0
        %v560 = vsel %vm551, %v543, 0.0
        %v561 = vsel %vm551, %v545, 0.0
        %v562 = vpack.c.bf16 %v553, %v552
        %v563 = vpack.c.bf16 %v555, %v554
        %v564 = vpack.c.bf16 %v557, %v556
        %v565 = vpack.c.bf16 %v559, %v558
        %v566 = vpack.c.bf16 %v561, %v560
        %s567 = scalar_lea.vmem [#allocation5], 96
        %v568 = vld [vmem:[%s567] sm:$0xf]
        %v569 = vld [vmem:[%s567 + $0x4] sm:$0xf]
        %v570 = vld [vmem:[%s567 + $0x8] sm:$0xf]
        %v571 = vld [vmem:[%s567 + $0xc] sm:$0xf]
        %v572 = vld [vmem:[%s567 + $0x10] sm:$0xf]
        %v573 = vld [vmem:[%s567 + $0x14] sm:$0xf]
        %v574 = vld [vmem:[%s567 + $0x18] sm:$0xf]
        %v575 = vld [vmem:[%s567 + $0x1c] sm:$0xf]
        %v584 = vunpack.c.l.b16 %v568
        %v585 = vunpack.c.l.b16 %v569
        %v586 = vunpack.c.l.b16 %v570
        %v587 = vunpack.c.l.b16 %v571
        %v588 = vunpack.c.l.b16 %v572
        %v589 = vunpack.c.l.b16 %v573
        %v590 = vunpack.c.l.b16 %v574
        %v591 = vunpack.c.l.b16 %v575
        %v592 = vpack.c.b16 %v585, %v584
        %v593 = vpack.c.b16 %v587, %v586
        %v594 = vpack.c.b16 %v589, %v588
        %v595 = vpack.c.b16 %v591, %v590
        %v597 = vsel %vm340, %v592, 0
        %v600 = vsel %vm340, %v593, 0
        %v603 = vsel %vm340, %v594, 0
        %v606 = vsel %vm340, %v595, 0
        %608 = vmatpush.bf16.msra.mxu0 0
        %609 = vmatpush.bf16.msra.mxu0 0
        %610 = vmatpush.bf16.msra.mxu0 0
        %611 = vmatpush.bf16.msra.mxu0 %v566
        %612 = vmatpush.bf16.msra.mxu0 %v565
        %613 = vmatpush.bf16.msra.mxu0 %v564
        %614 = vmatpush.bf16.msra.mxu0 %v563
        %615 = vmatpush.bf16.msra.mxu0 %v562
        %616 = vmatmul.bf16.gmra.mxu0 %v597
        %v617 = vpop.f32.mrf.mxu0
        %v618 = vadd.f32 0.0, %v617
        %v619 = vpop.f32.mrf.mxu0
        %v620 = vadd.f32 0.0, %v619
        %621 = vmatmul.bf16.gmra.mxu0 %v600
        %v622 = vpop.f32.mrf.mxu0
        %v623 = vadd.f32 0.0, %v622
        %v624 = vpop.f32.mrf.mxu0
        %v625 = vadd.f32 0.0, %v624
        %626 = vmatmul.bf16.gmra.mxu0 %v603
        %v627 = vpop.f32.mrf.mxu0
        %v628 = vadd.f32 0.0, %v627
        %v629 = vpop.f32.mrf.mxu0
        %v630 = vadd.f32 0.0, %v629
        %631 = vmatmul.bf16.gmra.mxu0 %v606
        %v632 = vpop.f32.mrf.mxu0
        %v633 = vadd.f32 0.0, %v632
        %v634 = vpop.f32.mrf.mxu0
        %v635 = vadd.f32 0.0, %v634
        %636 = vdwg.mxu0
        %v637 = vadd.f32 %v518, %v618
        %v638 = vadd.f32 %v519, %v620
        %v639 = vadd.f32 %v520, %v623
        %v640 = vadd.f32 %v521, %v625
        %v641 = vadd.f32 %v522, %v628
        %v642 = vadd.f32 %v523, %v630
        %v643 = vadd.f32 %v524, %v633
        %v644 = vadd.f32 %v525, %v635
        %645 = vrot.lane.b32.xlu0 %v209, 126
        %v646 = vpop.permute.xlu0 %645
        %647 = vrot.lane.b32.xlu0 %v210, 126
        %v648 = vpop.permute.xlu0 %647
        %649 = vrot.lane.b32.xlu0 %v211, 126
        %v650 = vpop.permute.xlu0 %649
        %651 = vrot.lane.b32.xlu0 %v212, 126
        %v652 = vpop.permute.xlu0 %651
        %653 = vrot.lane.b32.xlu0 %v213, 126
        %v654 = vpop.permute.xlu0 %653
        %655 = vrot.lane.b32.xlu0 %v214, 126
        %v656 = vpop.permute.xlu0 %655
        %657 = vrot.lane.b32.xlu0 %v215, 126
        %v658 = vpop.permute.xlu0 %657
        %659 = vrot.lane.b32.xlu0 %v216, 126
        %v660 = vpop.permute.xlu0 %659
        %661 = vrot.lane.b32.xlu0 %v217, 126
        %v662 = vpop.permute.xlu0 %661
        %663 = vrot.lane.b32.xlu0 %v218, 126
        %v664 = vpop.permute.xlu0 %663
        %v665 = vadd.s32 %v220, 2
        %vm666 = vcmp.ge.s32.totalorder %v665, 0
        %vm667 = vcmp.lt.s32.totalorder %v665, 120
        %vm668 = vmand %vm666, %vm667
        %v669 = vsel %vm668, 1, 0
        %vm670 = vcmp.eq.s32.totalorder %v669, 1
        %v671 = vsel %vm670, %v646, 0.0
        %v672 = vsel %vm670, %v648, 0.0
        %v673 = vsel %vm670, %v650, 0.0
        %v674 = vsel %vm670, %v652, 0.0
        %v675 = vsel %vm670, %v654, 0.0
        %v676 = vsel %vm670, %v656, 0.0
        %v677 = vsel %vm670, %v658, 0.0
        %v678 = vsel %vm670, %v660, 0.0
        %v679 = vsel %vm670, %v662, 0.0
        %v680 = vsel %vm670, %v664, 0.0
        %v681 = vpack.c.bf16 %v672, %v671
        %v682 = vpack.c.bf16 %v674, %v673
        %v683 = vpack.c.bf16 %v676, %v675
        %v684 = vpack.c.bf16 %v678, %v677
        %v685 = vpack.c.bf16 %v680, %v679
        %s686 = scalar_lea.vmem [#allocation5], 128
        %v687 = vld [vmem:[%s686] sm:$0xf]
        %v688 = vld [vmem:[%s686 + $0x4] sm:$0xf]
        %v689 = vld [vmem:[%s686 + $0x8] sm:$0xf]
        %v690 = vld [vmem:[%s686 + $0xc] sm:$0xf]
        %v691 = vld [vmem:[%s686 + $0x10] sm:$0xf]
        %v692 = vld [vmem:[%s686 + $0x14] sm:$0xf]
        %v693 = vld [vmem:[%s686 + $0x18] sm:$0xf]
        %v694 = vld [vmem:[%s686 + $0x1c] sm:$0xf]
        %v703 = vunpack.c.l.b16 %v687
        %v704 = vunpack.c.l.b16 %v688
        %v705 = vunpack.c.l.b16 %v689
        %v706 = vunpack.c.l.b16 %v690
        %v707 = vunpack.c.l.b16 %v691
        %v708 = vunpack.c.l.b16 %v692
        %v709 = vunpack.c.l.b16 %v693
        %v710 = vunpack.c.l.b16 %v694
        %v711 = vpack.c.b16 %v704, %v703
        %v712 = vpack.c.b16 %v706, %v705
        %v713 = vpack.c.b16 %v708, %v707
        %v714 = vpack.c.b16 %v710, %v709
        %v716 = vsel %vm340, %v711, 0
        %v719 = vsel %vm340, %v712, 0
        %v722 = vsel %vm340, %v713, 0
        %v725 = vsel %vm340, %v714, 0
        %727 = vmatpush.bf16.msra.mxu0 0
        %728 = vmatpush.bf16.msra.mxu0 0
        %729 = vmatpush.bf16.msra.mxu0 0
        %730 = vmatpush.bf16.msra.mxu0 %v685
        %731 = vmatpush.bf16.msra.mxu0 %v684
        %732 = vmatpush.bf16.msra.mxu0 %v683
        %733 = vmatpush.bf16.msra.mxu0 %v682
        %734 = vmatpush.bf16.msra.mxu0 %v681
        %735 = vmatmul.bf16.gmra.mxu0 %v716
        %v736 = vpop.f32.mrf.mxu0
        %v737 = vadd.f32 0.0, %v736
        %v738 = vpop.f32.mrf.mxu0
        %v739 = vadd.f32 0.0, %v738
        %740 = vmatmul.bf16.gmra.mxu0 %v719
        %v741 = vpop.f32.mrf.mxu0
        %v742 = vadd.f32 0.0, %v741
        %v743 = vpop.f32.mrf.mxu0
        %v744 = vadd.f32 0.0, %v743
        %745 = vmatmul.bf16.gmra.mxu0 %v722
        %v746 = vpop.f32.mrf.mxu0
        %v747 = vadd.f32 0.0, %v746
        %v748 = vpop.f32.mrf.mxu0
        %v749 = vadd.f32 0.0, %v748
        %750 = vmatmul.bf16.gmra.mxu0 %v725
        %v751 = vpop.f32.mrf.mxu0
        %v752 = vadd.f32 0.0, %v751
        %v753 = vpop.f32.mrf.mxu0
        %v754 = vadd.f32 0.0, %v753
        %755 = vdwg.mxu0
        %v756 = vadd.f32 %v637, %v737
        %v757 = vadd.f32 %v638, %v739
        %v758 = vadd.f32 %v639, %v742
        %v759 = vadd.f32 %v640, %v744
        %v760 = vadd.f32 %v641, %v747
        %v761 = vadd.f32 %v642, %v749
        %v762 = vadd.f32 %v643, %v752
        %v763 = vadd.f32 %v644, %v754
        %v764 = vld [vmem:[%s2] sm:$0xff]
        %v765 = vld [vmem:[%s2 + $0x8] sm:$0xff]
        %v766 = vld [vmem:[%s2 + $0x10] sm:$0xff]
        %v767 = vld [vmem:[%s2 + $0x18] sm:$0xff]
        %v768 = vld [vmem:[%s2 + $0x20] sm:$0xff]
        %v769 = vld [vmem:[%s2 + $0x28] sm:$0xff]
        %v770 = vld [vmem:[%s2 + $0x30] sm:$0xff]
        %v771 = vld [vmem:[%s2 + $0x38] sm:$0xff]
        %773 = vset.pattern.permute.xlu0 0
        %774 = vperm.xlu0 %773, %v764
        %v775 = vpop.permute.xlu0 %774
        %778 = vset.pattern.permute.xlu0 0
        %779 = vperm.xlu0 %778, %v765
        %v780 = vpop.permute.xlu0 %779
        %783 = vset.pattern.permute.xlu0 0
        %784 = vperm.xlu0 %783, %v766
        %v785 = vpop.permute.xlu0 %784
        %788 = vset.pattern.permute.xlu0 0
        %789 = vperm.xlu0 %788, %v767
        %v790 = vpop.permute.xlu0 %789
        %793 = vset.pattern.permute.xlu0 0
        %794 = vperm.xlu0 %793, %v768
        %v795 = vpop.permute.xlu0 %794
        %798 = vset.pattern.permute.xlu0 0
        %799 = vperm.xlu0 %798, %v769
        %v800 = vpop.permute.xlu0 %799
        %803 = vset.pattern.permute.xlu0 0
        %804 = vperm.xlu0 %803, %v770
        %v805 = vpop.permute.xlu0 %804
        %808 = vset.pattern.permute.xlu0 0
        %809 = vperm.xlu0 %808, %v771
        %v810 = vpop.permute.xlu0 %809
        %v812 = vadd.f32 %v756, %v775
        %v813 = vadd.f32 %v757, %v780
        %v814 = vadd.f32 %v758, %v785
        %v815 = vadd.f32 %v759, %v790
        %v816 = vadd.f32 %v760, %v795
        %v817 = vadd.f32 %v761, %v800
        %v818 = vadd.f32 %v762, %v805
        %v819 = vadd.f32 %v763, %v810
        %v820 = vmax.f32 %v812, 0.0
        %v821 = vmax.f32 %v813, 0.0
        %v822 = vmax.f32 %v814, 0.0
        %v823 = vmax.f32 %v815, 0.0
        %v824 = vmax.f32 %v816, 0.0
        %v825 = vmax.f32 %v817, 0.0
        %v826 = vmax.f32 %v818, 0.0
        %v827 = vmax.f32 %v819, 0.0
        %828 = vset.pattern.permute.xlu0 1
        %829 = vperm.xlu0 %828, %v764
        %v830 = vpop.permute.xlu0 %829
        %832 = vset.pattern.permute.xlu0 1
        %833 = vperm.xlu0 %832, %v765
        %v834 = vpop.permute.xlu0 %833
        %836 = vset.pattern.permute.xlu0 1
        %837 = vperm.xlu0 %836, %v766
        %v838 = vpop.permute.xlu0 %837
        %840 = vset.pattern.permute.xlu0 1
        %841 = vperm.xlu0 %840, %v767
        %v842 = vpop.permute.xlu0 %841
        %844 = vset.pattern.permute.xlu0 1
        %845 = vperm.xlu0 %844, %v768
        %v846 = vpop.permute.xlu0 %845
        %848 = vset.pattern.permute.xlu0 1
        %849 = vperm.xlu0 %848, %v769
        %v850 = vpop.permute.xlu0 %849
        %852 = vset.pattern.permute.xlu0 1
        %853 = vperm.xlu0 %852, %v770
        %v854 = vpop.permute.xlu0 %853
        %856 = vset.pattern.permute.xlu0 1
        %857 = vperm.xlu0 %856, %v771
        %v858 = vpop.permute.xlu0 %857
        %v860 = vmul.f32 %v820, %v830
        %v861 = vmul.f32 %v821, %v834
        %v862 = vmul.f32 %v822, %v838
        %v863 = vmul.f32 %v823, %v842
        %v864 = vmul.f32 %v824, %v846
        %v865 = vmul.f32 %v825, %v850
        %v866 = vmul.f32 %v826, %v854
        %v867 = vmul.f32 %v827, %v858
        %868 = vset.pattern.permute.xlu0 2
        %869 = vperm.xlu0 %868, %v764
        %v870 = vpop.permute.xlu0 %869
        %872 = vset.pattern.permute.xlu0 2
        %873 = vperm.xlu0 %872, %v765
        %v874 = vpop.permute.xlu0 %873
        %876 = vset.pattern.permute.xlu0 2
        %877 = vperm.xlu0 %876, %v766
        %v878 = vpop.permute.xlu0 %877
        %880 = vset.pattern.permute.xlu0 2
        %881 = vperm.xlu0 %880, %v767
        %v882 = vpop.permute.xlu0 %881
        %884 = vset.pattern.permute.xlu0 2
        %885 = vperm.xlu0 %884, %v768
        %v886 = vpop.permute.xlu0 %885
        %888 = vset.pattern.permute.xlu0 2
        %889 = vperm.xlu0 %888, %v769
        %v890 = vpop.permute.xlu0 %889
        %892 = vset.pattern.permute.xlu0 2
        %893 = vperm.xlu0 %892, %v770
        %v894 = vpop.permute.xlu0 %893
        %896 = vset.pattern.permute.xlu0 2
        %897 = vperm.xlu0 %896, %v771
        %v898 = vpop.permute.xlu0 %897
        %v900 = vadd.f32 %v860, %v870
        %v901 = vadd.f32 %v861, %v874
        %v902 = vadd.f32 %v862, %v878
        %v903 = vadd.f32 %v863, %v882
        %v904 = vadd.f32 %v864, %v886
        %v905 = vadd.f32 %v865, %v890
        %v906 = vadd.f32 %v866, %v894
        %v907 = vadd.f32 %v867, %v898
        %v908 = vpack.c.bf16 %v900, %v900
        %v909 = vpack.c.bf16 %v901, %v901
        %v910 = vpack.c.bf16 %v902, %v902
        %v911 = vpack.c.bf16 %v903, %v903
        %v912 = vpack.c.bf16 %v904, %v904
        %v913 = vpack.c.bf16 %v905, %v905
        %v914 = vpack.c.bf16 %v906, %v906
        %v915 = vpack.c.bf16 %v907, %v907
        %916 = vst [vmem:[%s207] sm:$0xf] %v908
        %917 = vst [vmem:[%s207 + $0x4] sm:$0xf] %v909
        %918 = vst [vmem:[%s207 + $0x8] sm:$0xf] %v910
        %919 = vst [vmem:[%s207 + $0xc] sm:$0xf] %v911
        %920 = vst [vmem:[%s207 + $0x10] sm:$0xf] %v912
        %921 = vst [vmem:[%s207 + $0x14] sm:$0xf] %v913
        %922 = vst [vmem:[%s207 + $0x18] sm:$0xf] %v914
        %923 = vst [vmem:[%s207 + $0x1c] sm:$0xf] %v915
        %s924 = sand.u32 %s97, 1
        %s925 = scalar_lea.sflag [#allocation4], %s924
        %s926 = sand.u32 %s97, 1
        %s927 = smul.addr %s926, 32
        %s928 = scalar_lea.vmem [#allocation7], %s927
        // Predicated region
        $region41: #{tpu_custom_call.1} parent=31 // pred_check
          %p929 = pneg %p107
        $region42: #{tpu_custom_call.1} parent=31 // pred_check_branch
          %931 = sbr.rel (%p929) target = $region44
        $region43: #{tpu_custom_call.1} parent=31 // pred_region
          %933 = vsyncadd %s925, 0
          %s934 = smul.addr %s21, 8
          %s935 = smul.addr %s934, 4
          %s936 = scalar_lea.hbm %s3, %s935
          %s937 = sshll.u32 %s928, 4
          %s938 = int_to_ptr.vmem [resolvable:$true] %s937
          %s939 = sshll.u32 %s936, 4
          %s940 = int_to_ptr.hbm [resolvable:$true] %s939
          %945 = dma.vmem_to_hbm [thread:$0]  %s938, 512, %s940, %s925, 64, 64, 4
        $region44: #{tpu_custom_call.1} parent=31 // pred_fallthru
          _
      $region32: #{tpu_custom_call.1} parent=5 // pred_fallthru
        _
      %p946 = scmp.le.s32.totalorder 2, %s16
      // Predicated region
      $region45: #{tpu_custom_call.1} parent=5 // pred_check
        %p947 = pneg %p946
      $region46: #{tpu_custom_call.1} parent=5 // pred_check_branch
        %949 = sbr.rel (%p947) target = $region48
      $region47: #{tpu_custom_call.1} parent=5 // pred_region
        %s950 = ssub.s32 %s16, 2
        // Predicated region
        $region49: #{tpu_custom_call.1} parent=47 // pred_check
          %p951 = pneg %p113
        $region50: #{tpu_custom_call.1} parent=47 // pred_check_branch
          %953 = sbr.rel (%p951) target = $region52
        $region51: #{tpu_custom_call.1} parent=47 // pred_region
          %s954 = sand.u32 %s98, 1
          %s955 = scalar_lea.sflag [#allocation4], %s954
          %s956 = sand.u32 %s98, 1
          %s957 = smul.addr %s956, 32
          %s958 = scalar_lea.vmem [#allocation7], %s957
          %960 = dma.done %s955, 512
        $region52: #{tpu_custom_call.1} parent=47 // pred_fallthru
          _
      $region48: #{tpu_custom_call.1} parent=5 // pred_fallthru
        _
    $region6: #{tpu_custom_call.1} parent=1 // loop_footer
      %s20 = sadd.s32 1, %s16
    $region7: #{tpu_custom_call.1} parent=1 // loop_footer_branch
      %15 = sbr.rel target = $region3
    $region8: #{tpu_custom_call.1} parent=1 // loop_exit
      _
    %961 = vsyncpa [#allocation3], 1
    %s962 = scalar_lea.sflag [#allocation3], 1
    %963 = vsyncpa %s962, 1
    %964 = vsyncpa [#allocation6], 1
    %965 = vsyncpa [#allocation4], 1
    %s966 = scalar_lea.sflag [#allocation4], 1
    %967 = vsyncpa %s966, 1

</llo_original>
